<compile_context>
chip_gen: v6e
topology: v6e:2x2x1
jax: 0.10.0
libtpu: 0.0.40
codegen_flags: <defaults>
</compile_context>

<pallas_src>
import jax
import jax.numpy as jnp
from jax.experimental import pallas as pl
from jax.experimental.pallas import tpu as pltpu


def _make_mlp_max_kernel(num_layers, bt, n_tile, n_valid, mask_tail):
    """Fused (bf16 matmul + bias + ReLU) x L, running max over the N grid axis."""

    def kernel(x_ref, *refs):
        # refs = [w0, b0, w1, b1, ..., out_ref, acc_ref]
        out_ref = refs[2 * num_layers]
        acc_ref = refs[2 * num_layers + 1]
        k = pl.program_id(1)

        @pl.when(k == 0)
        def _init():
            acc_ref[...] = jnp.full_like(acc_ref, -jnp.inf)

        cin = x_ref.shape[-1]
        h = x_ref[...].reshape(bt * n_tile, cin)          # bf16, M = Bt*N_tile
        for i in range(num_layers):
            w = refs[2 * i][...]                          # (Cin_i, Cout_i) bf16, BN scale folded
            b = refs[2 * i + 1][...]                      # (1, Cout_i) f32
            h = jnp.dot(h, w, preferred_element_type=jnp.float32)
            h = jnp.maximum(h + b, 0.0)                   # f32 epilogue (bias + ReLU)
            if i + 1 < num_layers:
                h = h.astype(jnp.bfloat16)                # bf16 operand for next MXU pass

        cout = h.shape[-1]
        h = h.reshape(bt, n_tile, cout)
        if mask_tail:
            # Padded tail points must not win the max.
            n_idx = jax.lax.broadcasted_iota(jnp.int32, (bt, n_tile, 1), 1)
            valid = (k * n_tile + n_idx) < n_valid
            h = jnp.where(valid, h, -jnp.inf)
        acc_ref[...] = jnp.maximum(acc_ref[...], jnp.max(h, axis=1))

        @pl.when(k == pl.num_programs(1) - 1)
        def _store():
            out_ref[0] = acc_ref[...]

    return kernel


def pointnet_sa_group_all(xyz, points, layer_params, *, max_n_tile=512):
    """
    xyz:    [B, 3, N] float32
    points: [B, D, N] float32 (or None)
    layer_params: list of (w_eff bf16 [Cin_i, Cout_i], bias f32 [1, Cout_i]),
                  BN scale already folded into w_eff.
    Returns: new_xyz [B, 3, 1], new_points [B, Cout_last, 1] (float32)
    """
    B, C, N = xyz.shape

    # sample_and_group_all + channel-last layout: [B, N, Cin], bf16 for MXU / DMA.
    feats = [jnp.transpose(xyz, (0, 2, 1))]
    if points is not None:
        feats.append(jnp.transpose(points, (0, 2, 1)))
    x = jnp.concatenate(feats, axis=-1).astype(jnp.bfloat16)
    cin = x.shape[-1]

    num_layers = len(layer_params)
    cout_last = layer_params[-1][0].shape[-1]
    cout_pad = ((cout_last + 127) // 128) * 128            # lane-dense output block

    kparams = list(layer_params)
    if cout_pad != cout_last:
        w_l, b_l = kparams[-1]
        kparams[-1] = (
            jnp.pad(w_l, ((0, 0), (0, cout_pad - cout_last))),
            jnp.pad(b_l, ((0, 0), (0, cout_pad - cout_last))),
        )

    # Tiling: N is the reduction axis; pack batches so the MXU M dim is >= ~256
    # where possible.  N_tile is either full N or a multiple-of-8 tile (512).
    n_tile = N if N <= max_n_tile else max_n_tile
    n_pad = -(-N // n_tile) * n_tile
    bt = min(B, max(1, -(-256 // n_tile)))
    b_pad = -(-B // bt) * bt
    num_bt = b_pad // bt
    num_nt = n_pad // n_tile

    if b_pad != B or n_pad != N:
        x = jnp.pad(x, ((0, b_pad - B), (0, n_pad - N), (0, 0)))
    x = x.reshape(num_bt, bt, n_pad, cin)

    kernel = _make_mlp_max_kernel(num_layers, bt, n_tile, N, n_pad != N)

    in_specs = [pl.BlockSpec((1, bt, n_tile, cin), lambda bi, ki: (bi, 0, ki, 0))]
    flat_params = []
    for (w, b) in kparams:
        in_specs.append(pl.BlockSpec(w.shape, lambda bi, ki: (0, 0)))
        in_specs.append(pl.BlockSpec(b.shape, lambda bi, ki: (0, 0)))
        flat_params += [w, b]

    out = pl.pallas_call(
        kernel,
        out_shape=jax.ShapeDtypeStruct((num_bt, bt, cout_pad), jnp.float32),
        grid_spec=pltpu.PrefetchScalarGridSpec(
            num_scalar_prefetch=0,
            grid=(num_bt, num_nt),
            in_specs=in_specs,
            out_specs=pl.BlockSpec((1, bt, cout_pad), lambda bi, ki: (bi, 0, 0)),
            scratch_shapes=[pltpu.VMEM((bt, cout_pad), jnp.float32)],
        ),
        compiler_params=pltpu.CompilerParams(
            dimension_semantics=("parallel", "arbitrary"),
            vmem_limit_bytes=32 * 1024 * 1024,
        ),
    )(x, *flat_params)

    new_points = out.reshape(b_pad, cout_pad)[:B, :cout_last][..., None]  # [B, Cout_last, 1]
    new_xyz = jnp.zeros((B, C, 1), dtype=xyz.dtype)                       # sample_and_group_all centroid
    return new_xyz, new_points


def _init_params(key, in_channel, mlp):
    """Deterministic Conv2d(1x1)+BatchNorm2d params; eval-mode BN folded, scale folded into W."""
    params = []
    last = in_channel
    eps = 1e-5
    for out_channel in mlp:
        key, k_w, k_cb, k_g, k_b, k_m, k_v = jax.random.split(key, 7)
        w = 0.1 * jax.random.normal(k_w, (out_channel, last), jnp.float32)     # Conv2d weight [Cout, Cin]
        cb = 0.1 * jax.random.normal(k_cb, (out_channel,), jnp.float32)        # Conv2d bias
        gamma = 1.0 + 0.05 * jax.random.normal(k_g, (out_channel,), jnp.float32)
        beta = 0.05 * jax.random.normal(k_b, (out_channel,), jnp.float32)
        r_mean = 0.05 * jax.random.normal(k_m, (out_channel,), jnp.float32)
        r_var = jnp.abs(1.0 + 0.05 * jax.random.normal(k_v, (out_channel,), jnp.float32))
        scale = gamma / jnp.sqrt(r_var + eps)                                  # [Cout]
        bias_eff = (cb - r_mean) * scale + beta                                # [Cout]
        w_eff = (w.T * scale[None, :]).astype(jnp.bfloat16)                    # [Cin, Cout], scale folded
        params.append((w_eff, bias_eff[None, :].astype(jnp.float32)))
        last = out_channel
    return params


def _ref_forward(xyz, points, layer_params):
    """Pure-JAX reference of the same forward (bf16 matmul operands, f32 accumulate)."""
    feats = [jnp.transpose(xyz, (0, 2, 1))]
    if points is not None:
        feats.append(jnp.transpose(points, (0, 2, 1)))
    h = jnp.concatenate(feats, axis=-1).astype(jnp.bfloat16)
    num_layers = len(layer_params)
    for i, (w, b) in enumerate(layer_params):
        y = jnp.einsum("bnc,cd->bnd", h, w, preferred_element_type=jnp.float32)
        y = jnp.maximum(y + b, 0.0)
        h = y.astype(jnp.bfloat16) if i + 1 < num_layers else y
    new_points = jnp.max(h, axis=1)[..., None]                 # [B, Cout_last, 1]
    new_xyz = jnp.zeros((xyz.shape[0], xyz.shape[1], 1), xyz.dtype)
    return new_xyz, new_points


if __name__ == "__main__":
    B, N = 2, 32
    C_xyz, D_feat = 3, 13
    in_channel = C_xyz + D_feat            # 16
    mlp = [32, 64]

    key = jax.random.PRNGKey(0)
    k_xyz, k_pts, k_par = jax.random.split(key, 3)
    xyz = jax.random.normal(k_xyz, (B, C_xyz, N), jnp.float32)
    points = jax.random.normal(k_pts, (B, D_feat, N), jnp.float32)
    params = _init_params(k_par, in_channel, mlp)

    new_xyz, new_points = pointnet_sa_group_all(xyz, points, params)
    jax.block_until_ready(new_points)

    ref_xyz, ref_points = _ref_forward(xyz, points, params)
    assert new_xyz.shape == (B, C_xyz, 1)
    assert new_points.shape == (B, mlp[-1], 1)
    assert jnp.allclose(new_points, ref_points, atol=5e-3, rtol=5e-3)
    assert jnp.allclose(new_xyz, ref_xyz)

    print("KERNEL_OK")
</pallas_src>

<mosaic_0001>
module attributes {stable_mosaic.version = 11 : i64} {
  func.func @kernel(%arg0: i32, %arg1: i32, %arg2: memref<1x2x32x16xbf16, #tpu.memory_space<vmem>>, %arg3: memref<16x32xbf16, #tpu.memory_space<vmem>>, %arg4: memref<1x32xf32, #tpu.memory_space<vmem>>, %arg5: memref<32x128xbf16, #tpu.memory_space<vmem>>, %arg6: memref<1x128xf32, #tpu.memory_space<vmem>>, %arg7: memref<1x2x128xf32, #tpu.memory_space<vmem>>, %arg8: memref<2x128xf32, #tpu.memory_space<vmem>>) attributes {dimension_semantics = [#tpu.dimension_semantics<parallel>, #tpu.dimension_semantics<arbitrary>], iteration_bounds = array<i64: 1, 1>, scalar_prefetch = 0 : i64, scratch_operands = 1 : i64, tpu.core_type = #tpu.core_type<tc>, window_params = [{transform_indices = @transform_0, window_bounds = array<i64: 1, 2, 32, 16>}, {pipeline_mode = #tpu.pipeline_mode<synchronous>, transform_indices = @transform_1, window_bounds = array<i64: 16, 32>}, {pipeline_mode = #tpu.pipeline_mode<synchronous>, transform_indices = @transform_2, window_bounds = array<i64: 1, 32>}, {pipeline_mode = #tpu.pipeline_mode<synchronous>, transform_indices = @transform_3, window_bounds = array<i64: 32, 128>}, {pipeline_mode = #tpu.pipeline_mode<synchronous>, transform_indices = @transform_4, window_bounds = array<i64: 1, 128>}, {transform_indices = @transform_5, window_bounds = array<i64: 1, 2, 128>}]} {
    %c0_i32 = arith.constant 0 : i32
    %0 = arith.cmpi eq, %arg1, %c0_i32 : i32
    %1 = arith.extui %0 : i1 to i32
    %c0_i32_0 = arith.constant 0 : i32
    %2 = arith.cmpi ne, %1, %c0_i32_0 : i32
    scf.if %2 {
      %cst_22 = arith.constant 0xFF800000 : f32
      %28 = vector.broadcast %cst_22 : f32 to vector<2x128xf32>
      %c0_23 = arith.constant 0 : index
      %c0_24 = arith.constant 0 : index
      %29 = vector.load %arg8[%c0_23, %c0_24] : memref<2x128xf32, #tpu.memory_space<vmem>>, vector<2x128xf32>
      tpu.vector_store %arg8[%c0_23, %c0_24], %28 {strides = array<i32>} : memref<2x128xf32, #tpu.memory_space<vmem>>, vector<2x128xf32>,
    } else {
    }
    %c0 = arith.constant 0 : index
    %c0_1 = arith.constant 0 : index
    %c0_2 = arith.constant 0 : index
    %c0_3 = arith.constant 0 : index
    %3 = vector.load %arg2[%c0, %c0_1, %c0_2, %c0_3] : memref<1x2x32x16xbf16, #tpu.memory_space<vmem>>, vector<1x2x32x16xbf16>
    %4 = vector.shape_cast %3 : vector<1x2x32x16xbf16> to vector<64x16xbf16>
    %c0_4 = arith.constant 0 : index
    %c0_5 = arith.constant 0 : index
    %5 = vector.load %arg3[%c0_4, %c0_5] : memref<16x32xbf16, #tpu.memory_space<vmem>>, vector<16x32xbf16>
    %c0_6 = arith.constant 0 : index
    %c0_7 = arith.constant 0 : index
    %6 = vector.load %arg4[%c0_6, %c0_7] : memref<1x32xf32, #tpu.memory_space<vmem>>, vector<1x32xf32>
    %cst = arith.constant dense<0.000000e+00> : vector<64x32xf32>
    %7 = tpu.matmul %4, %5, %cst {dimension_numbers = #tpu.dot_dimension_numbers<[1], [0], [0], [1], [0, 0, 1, 1], [], []>} : vector<64x16xbf16>, vector<16x32xbf16>, vector<64x32xf32> -> vector<64x32xf32>
    %8 = vector.broadcast %6 : vector<1x32xf32> to vector<64x32xf32>
    %9 = arith.addf %7, %8 : vector<64x32xf32>
    %cst_8 = arith.constant 0.000000e+00 : f32
    %10 = vector.broadcast %cst_8 : f32 to vector<64x32xf32>
    %11 = arith.maximumf %9, %10 : vector<64x32xf32>
    %12 = arith.truncf %11 : vector<64x32xf32> to vector<64x32xbf16>
    %c0_9 = arith.constant 0 : index
    %c0_10 = arith.constant 0 : index
    %13 = vector.load %arg5[%c0_9, %c0_10] : memref<32x128xbf16, #tpu.memory_space<vmem>>, vector<32x128xbf16>
    %c0_11 = arith.constant 0 : index
    %c0_12 = arith.constant 0 : index
    %14 = vector.load %arg6[%c0_11, %c0_12] : memref<1x128xf32, #tpu.memory_space<vmem>>, vector<1x128xf32>
    %cst_13 = arith.constant dense<0.000000e+00> : vector<64x128xf32>
    %15 = tpu.matmul %12, %13, %cst_13 {dimension_numbers = #tpu.dot_dimension_numbers<[1], [0], [0], [1], [0, 0, 1, 1], [], []>} : vector<64x32xbf16>, vector<32x128xbf16>, vector<64x128xf32> -> vector<64x128xf32>
    %16 = vector.broadcast %14 : vector<1x128xf32> to vector<64x128xf32>
    %17 = arith.addf %15, %16 : vector<64x128xf32>
    %cst_14 = arith.constant 0.000000e+00 : f32
    %18 = vector.broadcast %cst_14 : f32 to vector<64x128xf32>
    %19 = arith.maximumf %17, %18 : vector<64x128xf32>
    %20 = vector.shape_cast %19 : vector<64x128xf32> to vector<2x32x128xf32>
    %c0_15 = arith.constant 0 : index
    %c0_16 = arith.constant 0 : index
    %21 = vector.load %arg8[%c0_15, %c0_16] : memref<2x128xf32, #tpu.memory_space<vmem>>, vector<2x128xf32>
    %cst_17 = arith.constant dense<0xFF800000> : vector<2x128xf32>
    %22 = vector.multi_reduction <maximumf>, %20, %cst_17 [1] : vector<2x32x128xf32> to vector<2x128xf32>
    %23 = arith.maximumf %21, %22 : vector<2x128xf32>
    %c0_18 = arith.constant 0 : index
    %c0_19 = arith.constant 0 : index
    %24 = vector.load %arg8[%c0_18, %c0_19] : memref<2x128xf32, #tpu.memory_space<vmem>>, vector<2x128xf32>
    tpu.vector_store %arg8[%c0_18, %c0_19], %23 {strides = array<i32>} : memref<2x128xf32, #tpu.memory_space<vmem>>, vector<2x128xf32>,
    %c0_i32_20 = arith.constant 0 : i32
    %25 = arith.cmpi eq, %arg1, %c0_i32_20 : i32
    %26 = arith.extui %25 : i1 to i32
    %c0_i32_21 = arith.constant 0 : i32
    %27 = arith.cmpi ne, %26, %c0_i32_21 : i32
    scf.if %27 {
      %c0_22 = arith.constant 0 : index
      %c0_23 = arith.constant 0 : index
      %28 = vector.load %arg8[%c0_22, %c0_23] : memref<2x128xf32, #tpu.memory_space<vmem>>, vector<2x128xf32>
      %c0_24 = arith.constant 0 : index
      %c0_25 = arith.constant 0 : index
      %c0_26 = arith.constant 0 : index
      %29 = vector.load %arg7[%c0_24, %c0_25, %c0_26] : memref<1x2x128xf32, #tpu.memory_space<vmem>>, vector<1x2x128xf32>
      %30 = vector.shape_cast %29 : vector<1x2x128xf32> to vector<2x128xf32>
      %31 = vector.shape_cast %28 : vector<2x128xf32> to vector<1x2x128xf32>
      tpu.vector_store %arg7[%c0_24, %c0_25, %c0_26], %31 {strides = array<i32>} : memref<1x2x128xf32, #tpu.memory_space<vmem>>, vector<1x2x128xf32>,
    } else {
    }
    return
  }
  func.func @transform_0(%arg0: i32, %arg1: i32) -> (i32, i32, i32, i32) {
    %c0_i32 = arith.constant 0 : i32
    %c0_i32_0 = arith.constant 0 : i32
    %c0_i32_1 = arith.constant 0 : i32
    return %arg0, %c0_i32, %arg1, %c0_i32_0 : i32, i32, i32, i32
  }
  func.func @transform_1(%arg0: i32, %arg1: i32) -> (i32, i32) {
    %c0_i32 = arith.constant 0 : i32
    %c0_i32_0 = arith.constant 0 : i32
    %c0_i32_1 = arith.constant 0 : i32
    return %c0_i32, %c0_i32_0 : i32, i32
  }
  func.func @transform_2(%arg0: i32, %arg1: i32) -> (i32, i32) {
    %c0_i32 = arith.constant 0 : i32
    %c0_i32_0 = arith.constant 0 : i32
    %c0_i32_1 = arith.constant 0 : i32
    return %c0_i32, %c0_i32_0 : i32, i32
  }
  func.func @transform_3(%arg0: i32, %arg1: i32) -> (i32, i32) {
    %c0_i32 = arith.constant 0 : i32
    %c0_i32_0 = arith.constant 0 : i32
    %c0_i32_1 = arith.constant 0 : i32
    return %c0_i32, %c0_i32_0 : i32, i32
  }
  func.func @transform_4(%arg0: i32, %arg1: i32) -> (i32, i32) {
    %c0_i32 = arith.constant 0 : i32
    %c0_i32_0 = arith.constant 0 : i32
    %c0_i32_1 = arith.constant 0 : i32
    return %c0_i32, %c0_i32_0 : i32, i32
  }
  func.func @transform_5(%arg0: i32, %arg1: i32) -> (i32, i32, i32) {
    %c0_i32 = arith.constant 0 : i32
    %c0_i32_0 = arith.constant 0 : i32
    %c0_i32_1 = arith.constant 0 : i32
    return %arg0, %c0_i32, %c0_i32_0 : i32, i32, i32
  }
}

</mosaic_0001>

<llo_original>
// kernel: tpu_custom_call.1
$region0: #{tpu_custom_call.1}
  #allocation0 [shape = 'u32[]', space=smem, size = 0x4, offset = 0x4, fixed_abs, tag = 'smem constant byte address 0x4 - core index']
  #allocation1 [shape = 'u32[144,128]{1,0:T(1,128)}', space=vmem, size = 0x12000, scoped, tag = 'internal scratch']
  #allocation2 [shape = 'f32[2,128]{1,0:T(2,128)}', space=vmem, size = 0x400, scoped, tag = 'scratch operand']
  %s0 = inlined_call_operand.vmem [shape: bf16[1,2,32,16], index: 0, kind: input, shape index: {}]
  %s1 = inlined_call_operand.vmem [shape: bf16[16,32], index: 1, kind: input, shape index: {}]
  %s2 = inlined_call_operand.vmem [shape: f32[1,32], index: 2, kind: input, shape index: {}]
  %s3 = inlined_call_operand.vmem [shape: bf16[32,128], index: 3, kind: input, shape index: {}]
  %s4 = inlined_call_operand.vmem [shape: f32[1,128], index: 4, kind: input, shape index: {}]
  %s5 = inlined_call_operand.hbm [shape: f32[1,2,128], index: 5, kind: output, shape index: {}]
  %s6 = sld [smem:[#allocation0]]
  $region38: #{tpu_custom_call.1} parent=0
    _
  %s8 = ssub.s32 1, %s6
  %s9 = scalar_select 0, %s8, %s6
  $region1: #{tpu_custom_call.1} parent=0
    #allocation3 [shape = 'u8[1024]{0}', space=vmem, size = 0x400, scoped, tag = 'output window, operand 0, single buffered']
    #allocation4 [shape = 's32[1]{0}', space=sflag, size = 0x4, scoped, tag = 'scoped memory for tpu_custom_call.1']
    %10 = vsyncpa [#allocation4], 0
    // Predicated region
    $region2: #{tpu_custom_call.1} parent=1 // pred_check
      _
    $region3: #{tpu_custom_call.1} parent=1 // pred_check_branch
      %12 = sbr.rel (0) target = $region5
    $region4: #{tpu_custom_call.1} parent=1 // pred_region
      _
    $region5: #{tpu_custom_call.1} parent=1 // pred_fallthru
      _
    // Predicated region
    $region6: #{tpu_custom_call.1} parent=1 // pred_check
      _
    $region7: #{tpu_custom_call.1} parent=1 // pred_check_branch
      %14 = sbr.rel (0) target = $region9
    $region8: #{tpu_custom_call.1} parent=1 // pred_region
      _
    $region9: #{tpu_custom_call.1} parent=1 // pred_fallthru
      _
    // Predicated region
    $region10: #{tpu_custom_call.1} parent=1 // pred_check
      _
    $region11: #{tpu_custom_call.1} parent=1 // pred_check_branch
      %16 = sbr.rel (0) target = $region13
    $region12: #{tpu_custom_call.1} parent=1 // pred_region
      _
    $region13: #{tpu_custom_call.1} parent=1 // pred_fallthru
      _
    // Predicated region
    $region14: #{tpu_custom_call.1} parent=1 // pred_check
      _
    $region15: #{tpu_custom_call.1} parent=1 // pred_check_branch
      %18 = sbr.rel (0) target = $region17
    $region16: #{tpu_custom_call.1} parent=1 // pred_region
      _
    $region17: #{tpu_custom_call.1} parent=1 // pred_fallthru
      _
    // Predicated region
    $region18: #{tpu_custom_call.1} parent=1 // pred_check
      _
    $region19: #{tpu_custom_call.1} parent=1 // pred_check_branch
      %20 = sbr.rel (0) target = $region21
    $region20: #{tpu_custom_call.1} parent=1 // pred_region
      _
    $region21: #{tpu_custom_call.1} parent=1 // pred_fallthru
      _
    %p22 = scmp.eq.s32.totalorder 0, 0
    // Predicated region
    $region22: #{tpu_custom_call.1} parent=1 // pred_check
      %p23 = pneg %p22
    $region23: #{tpu_custom_call.1} parent=1 // pred_check_branch
      %25 = sbr.rel (%p23) target = $region25
    $region24: #{tpu_custom_call.1} parent=1 // pred_region
      %26 = vst [vmem:[#allocation2] sm:$0x3] -inf
    $region25: #{tpu_custom_call.1} parent=1 // pred_fallthru
      _
    %v27 = vld [vmem:[%s0] sm:$0xf]
    %v28 = vld [vmem:[%s0 + $0x4] sm:$0xf]
    %v29 = vld [vmem:[%s0 + $0x8] sm:$0xf]
    %v30 = vld [vmem:[%s0 + $0xc] sm:$0xf]
    %v31 = vld [vmem:[%s0 + $0x10] sm:$0xf]
    %v32 = vld [vmem:[%s0 + $0x14] sm:$0xf]
    %v33 = vld [vmem:[%s0 + $0x18] sm:$0xf]
    %v34 = vld [vmem:[%s0 + $0x1c] sm:$0xf]
    %v35 = vld [vmem:[%s1] sm:$0xf]
    %v36 = vld [vmem:[%s1 + $0x4] sm:$0xf]
    %v37 = vld [vmem:[%s2] sm:$0x1]
    %v39 = vlaneseq
    %v40 = vshrl.u32 %v39, 7
    %v41 = vsub.s32 0, %v40
    %v42 = vrot.slane %v37, %v41
    %v52 = vunpack.c.l.b16 %v27
    %v53 = vunpack.c.l.b16 %v28
    %v54 = vunpack.c.l.b16 %v29
    %v55 = vunpack.c.l.b16 %v30
    %v56 = vunpack.c.l.b16 %v31
    %v57 = vunpack.c.l.b16 %v32
    %v58 = vunpack.c.l.b16 %v33
    %v59 = vunpack.c.l.b16 %v34
    %v60 = vpack.c.b16 %v53, %v52
    %v61 = vpack.c.b16 %v55, %v54
    %v62 = vpack.c.b16 %v57, %v56
    %v63 = vpack.c.b16 %v59, %v58
    %v66 = vunpack.c.l.b16 %v35
    %v67 = vunpack.c.l.b16 %v36
    %v68 = vpack.c.b16 %v67, %v66
    %vm70 = vcmask 130048
    %v72 = vsel %vm70, %v60, 0
    %v75 = vsel %vm70, %v61, 0
    %v78 = vsel %vm70, %v62, 0
    %v81 = vsel %vm70, %v63, 0
    %83 = vmatprep.subr.bf16.mxu0 0
    %84 = vmatpush1.bf16.msra.mxu0 0
    %85 = vmatprep.subr.bf16.mxu0 0
    %86 = vmatpush1.bf16.msra.mxu0 0
    %87 = vmatprep.subr.bf16.mxu0 0
    %88 = vmatpush1.bf16.msra.mxu0 0
    %89 = vmatprep.subr.bf16.mxu0 0
    %90 = vmatpush1.bf16.msra.mxu0 0
    %91 = vmatprep.subr.bf16.mxu0 0
    %92 = vmatpush1.bf16.msra.mxu0 0
    %93 = vmatprep.subr.bf16.mxu0 0
    %94 = vmatpush1.bf16.msra.mxu0 0
    %95 = vmatprep.subr.bf16.mxu0 0
    %96 = vmatpush1.bf16.msra.mxu0 0
    %97 = vmatprep.subr.bf16.mxu0 0
    %98 = vmatpush1.bf16.msra.mxu0 %v68
    %99 = vmatprep.subr.bf16.mxu0 0
    %100 = vmatpush2.bf16.msra.mxu0 0
    %101 = vmatprep.subr.bf16.mxu0 0
    %102 = vmatpush2.bf16.msra.mxu0 0
    %103 = vmatprep.subr.bf16.mxu0 0
    %104 = vmatpush2.bf16.msra.mxu0 0
    %105 = vmatprep.subr.bf16.mxu0 0
    %106 = vmatpush2.bf16.msra.mxu0 0
    %107 = vmatprep.subr.bf16.mxu0 0
    %108 = vmatpush2.bf16.msra.mxu0 0
    %109 = vmatprep.subr.bf16.mxu0 0
    %110 = vmatpush2.bf16.msra.mxu0 0
    %111 = vmatprep.subr.bf16.mxu0 0
    %112 = vmatpush2.bf16.msra.mxu0 0
    %113 = vmatprep.subr.bf16.mxu0 0
    %114 = vmatpush2.bf16.msra.mxu0 0
    %115 = vmatprep.mubr.bf16.mxu0 0
    %116 = vmatmul.mubr.bf16.gmra.mxu0 %v72
    %v117 = vpop.f32.mrf.mxu0
    %v118 = vadd.f32 %v42, %v117
    %v119 = vpop.f32.mrf.mxu0
    %v120 = vpop.f32.mrf.mxu0
    %v121 = vadd.f32 %v42, %v120
    %v122 = vpop.f32.mrf.mxu0
    %123 = vmatprep.mubr.bf16.mxu0 0
    %124 = vmatmul.mubr.bf16.gmra.mxu0 %v75
    %v125 = vpop.f32.mrf.mxu0
    %v126 = vadd.f32 %v42, %v125
    %v127 = vpop.f32.mrf.mxu0
    %v128 = vpop.f32.mrf.mxu0
    %v129 = vadd.f32 %v42, %v128
    %v130 = vpop.f32.mrf.mxu0
    %131 = vmatprep.mubr.bf16.mxu0 0
    %132 = vmatmul.mubr.bf16.gmra.mxu0 %v78
    %v133 = vpop.f32.mrf.mxu0
    %v134 = vadd.f32 %v42, %v133
    %v135 = vpop.f32.mrf.mxu0
    %v136 = vpop.f32.mrf.mxu0
    %v137 = vadd.f32 %v42, %v136
    %v138 = vpop.f32.mrf.mxu0
    %139 = vmatprep.mubr.bf16.mxu0 0
    %140 = vmatmul.mubr.bf16.gmra.mxu0 %v81
    %v141 = vpop.f32.mrf.mxu0
    %v142 = vadd.f32 %v42, %v141
    %v143 = vpop.f32.mrf.mxu0
    %v144 = vpop.f32.mrf.mxu0
    %v145 = vadd.f32 %v42, %v144
    %v146 = vpop.f32.mrf.mxu0
    %147 = vdwg.mxu0
    %v148 = vmax.f32 %v118, 0.0
    %v149 = vmax.f32 %v121, 0.0
    %v150 = vmax.f32 %v126, 0.0
    %v151 = vmax.f32 %v129, 0.0
    %v152 = vmax.f32 %v134, 0.0
    %v153 = vmax.f32 %v137, 0.0
    %v154 = vmax.f32 %v142, 0.0
    %v155 = vmax.f32 %v145, 0.0
    %v156 = vpack.c.bf16 %v149, %v148
    %v157 = vpack.c.bf16 %v151, %v150
    %v158 = vpack.c.bf16 %v153, %v152
    %v159 = vpack.c.bf16 %v155, %v154
    %v160 = vld [vmem:[%s3] sm:$0xf]
    %v161 = vld [vmem:[%s3 + $0x4] sm:$0xf]
    %v162 = vld [vmem:[%s3 + $0x8] sm:$0xf]
    %v163 = vld [vmem:[%s3 + $0xc] sm:$0xf]
    %v164 = vld [vmem:[%s4] sm:$0x1]
    %v166 = vlaneseq
    %v167 = vshrl.u32 %v166, 7
    %v168 = vsub.s32 0, %v167
    %v169 = vrot.slane %v164, %v168
    %v175 = vunpack.c.l.b16 %v160
    %v176 = vunpack.c.l.b16 %v161
    %v177 = vunpack.c.l.b16 %v162
    %v178 = vunpack.c.l.b16 %v163
    %v179 = vpack.c.b16 %v176, %v175
    %v180 = vpack.c.b16 %v178, %v177
    %vm183 = vcmask 261120
    %v185 = vsel %vm183, %v156, 0
    %v188 = vsel %vm183, %v157, 0
    %v191 = vsel %vm183, %v158, 0
    %v194 = vsel %vm183, %v159, 0
    %196 = vmatprep.subr.bf16.mxu0 0
    %197 = vmatpush1.bf16.msra.mxu0 0
    %198 = vmatprep.subr.bf16.mxu0 0
    %199 = vmatpush1.bf16.msra.mxu0 0
    %200 = vmatprep.subr.bf16.mxu0 0
    %201 = vmatpush1.bf16.msra.mxu0 0
    %202 = vmatprep.subr.bf16.mxu0 0
    %203 = vmatpush1.bf16.msra.mxu0 0
    %204 = vmatprep.subr.bf16.mxu0 0
    %205 = vmatpush1.bf16.msra.mxu0 0
    %206 = vmatprep.subr.bf16.mxu0 0
    %207 = vmatpush1.bf16.msra.mxu0 0
    %208 = vmatprep.subr.bf16.mxu0 0
    %209 = vmatpush1.bf16.msra.mxu0 %v180
    %210 = vmatprep.subr.bf16.mxu0 0
    %211 = vmatpush1.bf16.msra.mxu0 %v179
    %212 = vmatprep.subr.bf16.mxu0 0
    %213 = vmatpush2.bf16.msra.mxu0 0
    %214 = vmatprep.subr.bf16.mxu0 0
    %215 = vmatpush2.bf16.msra.mxu0 0
    %216 = vmatprep.subr.bf16.mxu0 0
    %217 = vmatpush2.bf16.msra.mxu0 0
    %218 = vmatprep.subr.bf16.mxu0 0
    %219 = vmatpush2.bf16.msra.mxu0 0
    %220 = vmatprep.subr.bf16.mxu0 0
    %221 = vmatpush2.bf16.msra.mxu0 0
    %222 = vmatprep.subr.bf16.mxu0 0
    %223 = vmatpush2.bf16.msra.mxu0 0
    %224 = vmatprep.subr.bf16.mxu0 0
    %225 = vmatpush2.bf16.msra.mxu0 0
    %226 = vmatprep.subr.bf16.mxu0 0
    %227 = vmatpush2.bf16.msra.mxu0 0
    %228 = vmatprep.mubr.bf16.mxu0 0
    %229 = vmatmul.mubr.bf16.gmra.mxu0 %v185
    %v230 = vpop.f32.mrf.mxu0
    %v231 = vadd.f32 %v169, %v230
    %v232 = vpop.f32.mrf.mxu0
    %v233 = vpop.f32.mrf.mxu0
    %v234 = vadd.f32 %v169, %v233
    %v235 = vpop.f32.mrf.mxu0
    %236 = vmatprep.mubr.bf16.mxu0 0
    %237 = vmatmul.mubr.bf16.gmra.mxu0 %v188
    %v238 = vpop.f32.mrf.mxu0
    %v239 = vadd.f32 %v169, %v238
    %v240 = vpop.f32.mrf.mxu0
    %v241 = vpop.f32.mrf.mxu0
    %v242 = vadd.f32 %v169, %v241
    %v243 = vpop.f32.mrf.mxu0
    %244 = vmatprep.mubr.bf16.mxu0 0
    %245 = vmatmul.mubr.bf16.gmra.mxu0 %v191
    %v246 = vpop.f32.mrf.mxu0
    %v247 = vadd.f32 %v169, %v246
    %v248 = vpop.f32.mrf.mxu0
    %v249 = vpop.f32.mrf.mxu0
    %v250 = vadd.f32 %v169, %v249
    %v251 = vpop.f32.mrf.mxu0
    %252 = vmatprep.mubr.bf16.mxu0 0
    %253 = vmatmul.mubr.bf16.gmra.mxu0 %v194
    %v254 = vpop.f32.mrf.mxu0
    %v255 = vadd.f32 %v169, %v254
    %v256 = vpop.f32.mrf.mxu0
    %v257 = vpop.f32.mrf.mxu0
    %v258 = vadd.f32 %v169, %v257
    %v259 = vpop.f32.mrf.mxu0
    %260 = vdwg.mxu0
    %v261 = vmax.f32 %v231, 0.0
    %v262 = vmax.f32 %v234, 0.0
    %v263 = vmax.f32 %v239, 0.0
    %v264 = vmax.f32 %v242, 0.0
    %v265 = vmax.f32 %v247, 0.0
    %v266 = vmax.f32 %v250, 0.0
    %v267 = vmax.f32 %v255, 0.0
    %v268 = vmax.f32 %v258, 0.0
    %v269 = vld [vmem:[#allocation2] sm:$0x3]
    %v270 = vmax.f32 %v261, %v263
    %v271 = vmax.f32 %v262, %v264
    %v272 = vmax.f32 %v270, %v271
    %v273 = vrot.slane %v272, 4
    %v274 = vmax.f32 %v272, %v273
    %v275 = vrot.slane %v274, 2
    %v276 = vmax.f32 %v274, %v275
    %v277 = vrot.slane %v276, 1
    %v278 = vmax.f32 %v276, %v277
    %v279 = vmax.f32 %v265, %v267
    %v280 = vmax.f32 %v266, %v268
    %v281 = vmax.f32 %v279, %v280
    %v282 = vrot.slane %v281, 4
    %v283 = vmax.f32 %v281, %v282
    %v284 = vrot.slane %v283, 2
    %v285 = vmax.f32 %v283, %v284
    %v286 = vrot.slane %v285, 1
    %v287 = vmax.f32 %v285, %v286
    %vm290 = vcmask 1041409
    %v291 = vsel %vm290, %v287, %v278
    %v293 = vmax.f32 %v269, %v291
    %294 = vst [vmem:[#allocation2] sm:$0x3] %v293
    // Predicated region
    $region26: #{tpu_custom_call.1} parent=1 // pred_check
      %p295 = pneg %p22
    $region27: #{tpu_custom_call.1} parent=1 // pred_check_branch
      %297 = sbr.rel (%p295) target = $region29
    $region28: #{tpu_custom_call.1} parent=1 // pred_region
      %v298 = vld [vmem:[#allocation2] sm:$0x3]
      %299 = vst [vmem:[#allocation3] sm:$0x3] %v298
    $region29: #{tpu_custom_call.1} parent=1 // pred_fallthru
      _
    // Predicated region
    $region30: #{tpu_custom_call.1} parent=1 // pred_check
      _
    $region31: #{tpu_custom_call.1} parent=1 // pred_check_branch
      %301 = sbr.rel (0) target = $region33
    $region32: #{tpu_custom_call.1} parent=1 // pred_region
      %s303 = ssub.s32 32, 32
      %304 = vsyncadd [#allocation4], %s303
      %s306 = sshll.u32 [#allocation3], 4
      %s307 = int_to_ptr.vmem [resolvable:$true] %s306
      %309 = dma.vmem_to_hbm [thread:$0]  %s307, 32, %s5, [#allocation4]
    $region33: #{tpu_custom_call.1} parent=1 // pred_fallthru
      _
    // Predicated region
    $region34: #{tpu_custom_call.1} parent=1 // pred_check
      _
    $region35: #{tpu_custom_call.1} parent=1 // pred_check_branch
      %311 = sbr.rel (0) target = $region37
    $region36: #{tpu_custom_call.1} parent=1 // pred_region
      %312 = dma.done [#allocation4], 32
    $region37: #{tpu_custom_call.1} parent=1 // pred_fallthru
      _
    %313 = vsyncpa [#allocation4], 1

</llo_original>
